<compile_context>
chip_gen: v7x
topology: tpu7x:2x2x1
jax: 0.10.0
libtpu: 0.0.40
codegen_flags: <defaults>
</compile_context>

<pallas_src>
import jax
import jax.numpy as jnp
from jax.experimental import pallas as pl
from jax.experimental.pallas import tpu as pltpu


def _round_up(v, m):
    return (v + m - 1) // m * m


def mlp_kernel(x_ref, w1_ref, b1_ref, w2_ref, b2_ref, o_ref):
    # Lane-dense layout: batch N is the last (lane) axis.
    #   x_ref : (1, Npad)       f32  -- input feature row (F == 1)
    #   w1_ref: (Hpad, 1)       f32  -- hidden-layer weight column
    #   b1_ref: (Hpad, 1)       f32  -- hidden-layer bias column
    #   w2_ref: (Hpad, 1)       f32  -- output-layer weight column
    #   b2_ref: (1, 1) in SMEM  f32  -- output-layer bias scalar
    #   o_ref : (1, Npad)       f32
    x_row = x_ref[...]                                        # (1, Npad)
    # Layer 1 (K = F = 1): outer product on the VPU, no MXU involved.
    h = jnp.maximum(w1_ref[...] * x_row + b1_ref[...], 0.0)   # (Hpad, Npad)
    # Layer 2 (O = 1): elementwise multiply + small sublane reduce (XLU).
    acc = jnp.sum(h * w2_ref[...], axis=0, keepdims=True)     # (1, Npad)
    o_ref[...] = acc + b2_ref[0, 0]                           # scalar bias from SMEM


def net_forward(x, w1, b1, w2, b2):
    """Forward pass of Net (torch layouts).

    x : (N, F) with F == 1
    w1: (H, F)        -- torch nn.Linear(hidden).weight
    b1: (H,)          -- torch nn.Linear(hidden).bias
    w2: (O, H) O == 1 -- torch nn.Linear(predict).weight
    b2: (O,)          -- torch nn.Linear(predict).bias
    returns (N, O) float32
    """
    N, F = x.shape
    H = w1.shape[0]
    O = w2.shape[0]
    assert F == 1 and O == 1, "kernel is specialized to n_feature=1, n_output=1"

    n_pad = _round_up(max(N, 128), 128)   # lane axis: multiple of 128
    h_pad = _round_up(max(H, 8), 8)       # sublane axis: multiple of 8

    # Transposed, lane-dense, zero-padded operands.  Zero-padded w2 rows make
    # the padded hidden rows contribute exactly 0 to the final reduction.
    x_t = jnp.zeros((1, n_pad), jnp.float32).at[0, :N].set(x[:, 0].astype(jnp.float32))
    w1_col = jnp.zeros((h_pad, 1), jnp.float32).at[:H, 0].set(w1[:, 0])
    b1_col = jnp.zeros((h_pad, 1), jnp.float32).at[:H, 0].set(b1)
    w2_col = jnp.zeros((h_pad, 1), jnp.float32).at[:H, 0].set(w2[0, :])
    b2_s = b2.reshape(1, 1).astype(jnp.float32)

    out_t = pl.pallas_call(
        mlp_kernel,
        out_shape=jax.ShapeDtypeStruct((1, n_pad), jnp.float32),
        in_specs=[
            pl.BlockSpec(memory_space=pltpu.MemorySpace.VMEM),   # x_t
            pl.BlockSpec(memory_space=pltpu.MemorySpace.VMEM),   # w1
            pl.BlockSpec(memory_space=pltpu.MemorySpace.VMEM),   # b1
            pl.BlockSpec(memory_space=pltpu.MemorySpace.VMEM),   # w2
            pl.BlockSpec(memory_space=pltpu.MemorySpace.SMEM),   # b2 scalar
        ],
        out_specs=pl.BlockSpec(memory_space=pltpu.MemorySpace.VMEM),
    )(x_t, w1_col, b1_col, w2_col, b2_s)

    # Back to the original (N, O) batch-major layout; drop lane padding.
    return out_t[0, :N].reshape(N, O)


def init_params(key, n_feature, n_hidden, n_output):
    """Deterministic init mimicking torch.nn.Linear's U(-1/sqrt(fan_in), ...).

    Weights kept in torch layout: w1 (H, F), w2 (O, H).
    """
    k1, k2, k3, k4 = jax.random.split(key, 4)
    bound1 = 1.0 / jnp.sqrt(jnp.float32(n_feature))
    bound2 = 1.0 / jnp.sqrt(jnp.float32(n_hidden))
    w1 = jax.random.uniform(k1, (n_hidden, n_feature), jnp.float32, -bound1, bound1)
    b1 = jax.random.uniform(k2, (n_hidden,), jnp.float32, -bound1, bound1)
    w2 = jax.random.uniform(k3, (n_output, n_hidden), jnp.float32, -bound2, bound2)
    b2 = jax.random.uniform(k4, (n_output,), jnp.float32, -bound2, bound2)
    return w1, b1, w2, b2


if __name__ == "__main__":
    # Shapes implied by the reference script: x = linspace(-1, 1, 100)[:, None],
    # Net(n_feature=1, n_hidden=10, n_output=1).
    n_feature, n_hidden, n_output = 1, 10, 1
    N = 100

    key = jax.random.PRNGKey(0)
    w1, b1, w2, b2 = init_params(key, n_feature, n_hidden, n_output)

    # x = unsqueeze(linspace(-1, 1, 100), dim=1)  -> (100, 1)
    x = jnp.linspace(-1.0, 1.0, N, dtype=jnp.float32).reshape(N, 1)

    out = net_forward(x, w1, b1, w2, b2)
    out = jax.block_until_ready(out)

    # Pure-JAX reference with torch.nn.Linear semantics: y = x @ W.T + b.
    ref = jnp.maximum(x @ w1.T + b1, 0.0) @ w2.T + b2
    assert out.shape == (N, n_output)
    assert jnp.allclose(out, ref, atol=1e-5, rtol=1e-5)

    print("KERNEL_OK")
</pallas_src>

<mosaic_0001>
module attributes {stable_mosaic.version = 11 : i64} {
  func.func @mlp_kernel(%arg0: memref<1x128xf32, #tpu.memory_space<vmem>>, %arg1: memref<16x1xf32, #tpu.memory_space<vmem>>, %arg2: memref<16x1xf32, #tpu.memory_space<vmem>>, %arg3: memref<16x1xf32, #tpu.memory_space<vmem>>, %arg4: memref<1x1xf32, #tpu.memory_space<smem>>, %arg5: memref<1x128xf32, #tpu.memory_space<vmem>>) attributes {dimension_semantics = [], scalar_prefetch = 0 : i64, scratch_operands = 0 : i64, tpu.core_type = #tpu.core_type<tc>} {
    %c0 = arith.constant 0 : index
    %c0_0 = arith.constant 0 : index
    %0 = vector.load %arg0[%c0, %c0_0] : memref<1x128xf32, #tpu.memory_space<vmem>>, vector<1x128xf32>
    %c0_1 = arith.constant 0 : index
    %c0_2 = arith.constant 0 : index
    %1 = vector.load %arg1[%c0_1, %c0_2] : memref<16x1xf32, #tpu.memory_space<vmem>>, vector<16x1xf32>
    %2 = vector.broadcast %1 : vector<16x1xf32> to vector<16x128xf32>
    %3 = vector.broadcast %0 : vector<1x128xf32> to vector<16x128xf32>
    %4 = arith.mulf %2, %3 : vector<16x128xf32>
    %c0_3 = arith.constant 0 : index
    %c0_4 = arith.constant 0 : index
    %5 = vector.load %arg2[%c0_3, %c0_4] : memref<16x1xf32, #tpu.memory_space<vmem>>, vector<16x1xf32>
    %6 = vector.broadcast %5 : vector<16x1xf32> to vector<16x128xf32>
    %7 = arith.addf %4, %6 : vector<16x128xf32>
    %cst = arith.constant 0.000000e+00 : f32
    %8 = vector.broadcast %cst : f32 to vector<16x128xf32>
    %9 = arith.maximumf %7, %8 : vector<16x128xf32>
    %c0_5 = arith.constant 0 : index
    %c0_6 = arith.constant 0 : index
    %10 = vector.load %arg3[%c0_5, %c0_6] : memref<16x1xf32, #tpu.memory_space<vmem>>, vector<16x1xf32>
    %11 = vector.broadcast %10 : vector<16x1xf32> to vector<16x128xf32>
    %12 = arith.mulf %9, %11 : vector<16x128xf32>
    %cst_7 = arith.constant dense<0.000000e+00> : vector<128xf32>
    %13 = vector.multi_reduction <add>, %12, %cst_7 [0] : vector<16x128xf32> to vector<128xf32>
    %14 = vector.shape_cast %13 : vector<128xf32> to vector<1x128xf32>
    %c0_8 = arith.constant 0 : index
    %c0_9 = arith.constant 0 : index
    %15 = memref.load %arg4[%c0_8, %c0_9] : memref<1x1xf32, #tpu.memory_space<smem>>
    %16 = vector.broadcast %15 : f32 to vector<1x128xf32>
    %17 = arith.addf %14, %16 : vector<1x128xf32>
    %c0_10 = arith.constant 0 : index
    %c0_11 = arith.constant 0 : index
    %18 = vector.load %arg5[%c0_10, %c0_11] : memref<1x128xf32, #tpu.memory_space<vmem>>, vector<1x128xf32>
    tpu.vector_store %arg5[%c0_10, %c0_11], %17 {strides = array<i32>} : memref<1x128xf32, #tpu.memory_space<vmem>>, vector<1x128xf32>,
    return
  }
}

</mosaic_0001>

<llo_original>
// kernel: tpu_custom_call.1
$region0: #{tpu_custom_call.1}
  #allocation0 [shape = 'u32[]', space=smem, size = 0x4, offset = 0x4, fixed_abs, tag = 'smem constant byte address 0x4 - core index']
  #allocation1 [shape = 'u32[144,128]{1,0:T(1,128)}', space=vmem, size = 0x12000, scoped, tag = 'internal scratch']
  #allocation2 [shape = 'f32[1,1]{1,0:T(1,128)S(6)}', space=smem, size = 0x200, scoped, tag = 'scoped memory for tpu_custom_call.1']
  %s0 = inlined_call_operand.vmem [shape: f32[1,128], index: 0, kind: input, shape index: {}]
  %s1 = inlined_call_operand.vmem [shape: f32[16,1], index: 1, kind: input, shape index: {}]
  %s2 = inlined_call_operand.vmem [shape: f32[16,1], index: 2, kind: input, shape index: {}]
  %s3 = inlined_call_operand.vmem [shape: f32[16,1], index: 3, kind: input, shape index: {}]
  %s4 = inlined_call_operand.<no memory space> [shape: f32[1,1], index: 4, kind: input, shape index: {}]
  %s5 = inlined_call_operand.hbm [shape: f32[1,128], index: 5, kind: output, shape index: {}]
  %s6 = sld [smem:[#allocation0]]
  $region30: #{tpu_custom_call.1} parent=0
    _
  %s8 = ssub.s32 1, %s6
  %s9 = scalar_select 0, %s8, %s6
  %10 = sst [smem:[#allocation2]] %s4
  $region1: #{tpu_custom_call.1} parent=0
    #allocation3 [shape = 'u8[512]{0}', space=vmem, size = 0x400, scoped, tag = 'output window, operand 0, single buffered']
    #allocation4 [shape = 's32[1]{0}', space=sflag, size = 0x4, scoped, tag = 'scoped memory for tpu_custom_call.1']
    %11 = vsyncpa [#allocation4], 0
    // Predicated region
    $region2: #{tpu_custom_call.1} parent=1 // pred_check
      _
    $region3: #{tpu_custom_call.1} parent=1 // pred_check_branch
      %13 = sbr.rel (0) target = $region5
    $region4: #{tpu_custom_call.1} parent=1 // pred_region
      _
    $region5: #{tpu_custom_call.1} parent=1 // pred_fallthru
      _
    // Predicated region
    $region6: #{tpu_custom_call.1} parent=1 // pred_check
      _
    $region7: #{tpu_custom_call.1} parent=1 // pred_check_branch
      %15 = sbr.rel (0) target = $region9
    $region8: #{tpu_custom_call.1} parent=1 // pred_region
      _
    $region9: #{tpu_custom_call.1} parent=1 // pred_fallthru
      _
    // Predicated region
    $region10: #{tpu_custom_call.1} parent=1 // pred_check
      _
    $region11: #{tpu_custom_call.1} parent=1 // pred_check_branch
      %17 = sbr.rel (0) target = $region13
    $region12: #{tpu_custom_call.1} parent=1 // pred_region
      _
    $region13: #{tpu_custom_call.1} parent=1 // pred_fallthru
      _
    // Predicated region
    $region14: #{tpu_custom_call.1} parent=1 // pred_check
      _
    $region15: #{tpu_custom_call.1} parent=1 // pred_check_branch
      %19 = sbr.rel (0) target = $region17
    $region16: #{tpu_custom_call.1} parent=1 // pred_region
      _
    $region17: #{tpu_custom_call.1} parent=1 // pred_fallthru
      _
    // Predicated region
    $region18: #{tpu_custom_call.1} parent=1 // pred_check
      _
    $region19: #{tpu_custom_call.1} parent=1 // pred_check_branch
      %21 = sbr.rel (0) target = $region21
    $region20: #{tpu_custom_call.1} parent=1 // pred_region
      _
    $region21: #{tpu_custom_call.1} parent=1 // pred_fallthru
      _
    %v22 = vld [vmem:[%s0] sm:$0x1]
    %v23 = vld [vmem:[%s1] sm:$0xff]
    %v24 = vld [vmem:[%s1 + $0x8] sm:$0xff]
    %26 = vset.pattern.permute.xlu0 0
    %27 = vperm.xlu0 %26, %v23
    %v28 = vpop.permute.xlu0 %27
    %31 = vset.pattern.permute.xlu0 0
    %32 = vperm.xlu0 %31, %v24
    %v33 = vpop.permute.xlu0 %32
    %v36 = vlaneseq
    %v37 = vshrl.u32 %v36, 7
    %v38 = vsub.s32 0, %v37
    %v39 = vrot.slane %v22, %v38
    %v41 = vmul.f32 %v28, %v39
    %v42 = vmul.f32 %v33, %v39
    %v43 = vld [vmem:[%s2] sm:$0xff]
    %v44 = vld [vmem:[%s2 + $0x8] sm:$0xff]
    %46 = vset.pattern.permute.xlu0 0
    %47 = vperm.xlu0 %46, %v43
    %v48 = vpop.permute.xlu0 %47
    %51 = vset.pattern.permute.xlu0 0
    %52 = vperm.xlu0 %51, %v44
    %v53 = vpop.permute.xlu0 %52
    %v55 = vadd.f32 %v41, %v48
    %v56 = vadd.f32 %v42, %v53
    %v57 = vmax.f32 %v55, 0.0
    %v58 = vmax.f32 %v56, 0.0
    %v59 = vld [vmem:[%s3] sm:$0xff]
    %v60 = vld [vmem:[%s3 + $0x8] sm:$0xff]
    %62 = vset.pattern.permute.xlu0 0
    %63 = vperm.xlu0 %62, %v59
    %v64 = vpop.permute.xlu0 %63
    %67 = vset.pattern.permute.xlu0 0
    %68 = vperm.xlu0 %67, %v60
    %v69 = vpop.permute.xlu0 %68
    %v71 = vmul.f32 %v57, %v64
    %v72 = vmul.f32 %v58, %v69
    %v73 = vadd.f32 %v71, %v72
    %v74 = vrot.slane %v73, 4
    %v75 = vadd.f32 %v73, %v74
    %v76 = vrot.slane %v75, 2
    %v77 = vadd.f32 %v75, %v76
    %v78 = vrot.slane %v77, 1
    %v79 = vadd.f32 %v77, %v78
    %s80 = sld [smem:[#allocation2]]
    %v81 = vstv %s80
    %v82 = vadd.f32 %v79, %v81
    %83 = vst [vmem:[#allocation3] sm:$0x1] %v82
    // Predicated region
    $region22: #{tpu_custom_call.1} parent=1 // pred_check
      _
    $region23: #{tpu_custom_call.1} parent=1 // pred_check_branch
      %85 = sbr.rel (0) target = $region25
    $region24: #{tpu_custom_call.1} parent=1 // pred_region
      %s87 = ssub.s32 16, 16
      %88 = vsyncadd [#allocation4], %s87
      %s90 = sshll.u32 [#allocation3], 4
      %s91 = int_to_ptr.vmem [resolvable:$true] %s90
      %93 = dma.vmem_to_hbm [thread:$0]  %s91, 16, %s5, [#allocation4]
    $region25: #{tpu_custom_call.1} parent=1 // pred_fallthru
      _
    // Predicated region
    $region26: #{tpu_custom_call.1} parent=1 // pred_check
      _
    $region27: #{tpu_custom_call.1} parent=1 // pred_check_branch
      %95 = sbr.rel (0) target = $region29
    $region28: #{tpu_custom_call.1} parent=1 // pred_region
      %96 = dma.done [#allocation4], 16
    $region29: #{tpu_custom_call.1} parent=1 // pred_fallthru
      _
    %97 = vsyncpa [#allocation4], 1

</llo_original>
